<compile_context>
chip_gen: v7x
topology: tpu7x:2x2x1
jax: 0.10.0
libtpu: 0.0.40
codegen_flags: <defaults>
</compile_context>

<pallas_src>
import types

import jax
import jax.numpy as jnp
from jax import lax
from jax.experimental import pallas as pl
from jax.experimental.pallas import tpu as pltpu

LANES = 128  # f32 vreg lane width; readout logits packed into a lane-dense slab


# ----------------------------------------------------------------------------
# Fused Pallas kernel: GNN layer + ReLU + row gather + pos/neg readout
# ----------------------------------------------------------------------------
def _fused_tgat_kernel(n_local, n_edges, n_batch):
    B = n_batch

    def kernel(z_ref, msg_ref, t_ref, lu_ref, dst_row_ref, dst_col_ref,
               src_col_ref, ro_idx_ref, w_time_ref, w_gnn_ref, b_gnn_ref,
               w12_ref, b1_ref, w3_ref, b3_ref, out_ref):
        f32 = jnp.float32
        z = z_ref[...]                                                   # (N, Z)

        # ---- mean-aggregation operators built in-kernel (no HBM scatter) ----
        iota_ne = lax.broadcasted_iota(jnp.int32, (n_local, n_edges), 0)
        s_mask = (iota_ne == dst_row_ref[...]).astype(f32)               # (N, E)
        deg = jnp.sum(s_mask, axis=-1, keepdims=True)                    # (N, 1)
        s_op = s_mask * (1.0 / jnp.maximum(deg, 1.0))                    # (N, E)

        iota_en = lax.broadcasted_iota(jnp.int32, (n_edges, n_local), 1)
        src_oh = (iota_en == src_col_ref[...]).astype(f32)               # (E, N)
        dst_oh = (iota_en == dst_col_ref[...]).astype(f32)               # (E, N)

        # ---- per-edge features: [ z[src] | msg | cos((t - lu[dst]) * w) ] ----
        lu_e = jnp.sum(dst_oh * lu_ref[...], axis=-1, keepdims=True)     # (E, 1)
        rel_t = t_ref[...] - lu_e                                        # (E, 1)
        time_enc = jnp.cos(rel_t * w_time_ref[...])                      # (E, Dt) EUP
        z_src_e = jnp.dot(src_oh, z, preferred_element_type=f32)         # (E, Z)
        edge_feat = jnp.concatenate([z_src_e, msg_ref[...], time_enc], axis=-1)

        # one MXU op aggregates all three streams to destination nodes
        agg = jnp.dot(s_op, edge_feat, preferred_element_type=f32)       # (N, Z+M+Dt)

        # single deep matmul: [z | agg_z | agg_m | agg_t] @ [Wself;Wnz;Wnm;Wnt]
        h_in = jnp.concatenate([z, agg], axis=-1)                        # (N, 2Z+M+Dt)
        h = jnp.maximum(
            jnp.dot(h_in, w_gnn_ref[...], preferred_element_type=f32)
            + b_gnn_ref[...], 0.0)                                       # (N, H)

        # ---- gather z rows for (src, pos_dst, neg_dst) via one-hot matmul ----
        sel = (lax.broadcasted_iota(jnp.int32, (3 * B, n_local), 1)
               == ro_idx_ref[...]).astype(f32)                           # (3B, N)
        g = jnp.dot(sel, h, preferred_element_type=f32)                  # (3B, H)
        zs, zp, zn = g[:B], g[B:2 * B], g[2 * B:]

        # ---- fused LinkPredictor readout, pos & neg stacked on rows ----
        rows = jnp.concatenate(
            [jnp.concatenate([zs, zp], axis=-1),
             jnp.concatenate([zs, zn], axis=-1)], axis=0)                # (2B, 2H)
        hid = jnp.maximum(
            jnp.dot(rows, w12_ref[...], preferred_element_type=f32)
            + b1_ref[...], 0.0)                                          # (2B, ROH)
        # lane-dense output slab: column 0 holds the logits
        out_ref[...] = (jnp.dot(hid, w3_ref[...], preferred_element_type=f32)
                        + b3_ref[...])                                   # (2B, 128)

    return kernel


def tgat_fused_call(packed, z, msg, t, last_update, src_l, dst_l, ro_idx):
    n_local = z.shape[0]
    n_edges = msg.shape[0]
    b = ro_idx.shape[0] // 3
    kernel = _fused_tgat_kernel(n_local, n_edges, b)
    vmem = pl.BlockSpec(memory_space=pltpu.MemorySpace.VMEM)
    return pl.pallas_call(
        kernel,
        out_shape=jax.ShapeDtypeStruct((2 * b, LANES), jnp.float32),
        in_specs=[vmem] * 15,
        out_specs=vmem,
        compiler_params=pltpu.CompilerParams(
            vmem_limit_bytes=32 * 1024 * 1024),
    )(z, msg,
      t.astype(jnp.float32)[:, None],                 # (E, 1)
      last_update.astype(jnp.float32)[None, :],       # (1, N)
      dst_l[None, :], dst_l[:, None], src_l[:, None], # (1,E), (E,1), (E,1)
      ro_idx[:, None],                                # (3B, 1)
      packed["w_time"], packed["w_gnn"], packed["b_gnn"],
      packed["w12"], packed["b1"], packed["w3_pad"], packed["b3_pad"])


# ----------------------------------------------------------------------------
# Forward pass (predict_dst = False branch)
# ----------------------------------------------------------------------------
def tgat_forward(params, packed, batch, n_id, msg, t, edge_index, id_mapper):
    # --- memory(n_id): global-table gathers stay in XLA glue -----------------
    m = params["memory"][n_id]                      # (N, MEM)
    last_update = params["last_update"][n_id]       # (N,)

    x = batch.x
    if x.ndim == 3:
        x = x[0]
    elif x.ndim != 2:
        raise ValueError(f"Unexpected node feature shape. Got {x.shape}")
    z = jnp.concatenate([m, x[n_id]], axis=-1)      # (N, MEM+F)

    src_l = edge_index[0].astype(jnp.int32)
    dst_l = edge_index[1].astype(jnp.int32)

    src, pos_dst = batch.src, batch.dst
    neg_dst = getattr(batch, "neg_dst", None)
    src_loc = id_mapper[src].astype(jnp.int32)
    pos_loc = id_mapper[pos_dst].astype(jnp.int32)
    neg_loc = (id_mapper[neg_dst].astype(jnp.int32)
               if neg_dst is not None else pos_loc)
    ro_idx = jnp.concatenate([src_loc, pos_loc, neg_loc], axis=0)   # (3B,)
    b = src.shape[0]

    out = tgat_fused_call(packed, z, msg, t, last_update, src_l, dst_l, ro_idx)
    pos_out = out[:b, 0:1]
    neg_out = out[b:2 * b, 0:1] if neg_dst is not None else None
    return pos_out, neg_out, m[src_loc], m[pos_loc]


# ----------------------------------------------------------------------------
# Parameters: raw + one-time packed/stacked weights for the fused kernel
# ----------------------------------------------------------------------------
def make_params(key, num_nodes, mem_dim, feat_dim, hid_dim, msg_dim, time_dim,
                ro_hid):
    ks = jax.random.split(key, 12)
    z_dim = mem_dim + feat_dim
    scale = lambda fan_in: 1.0 / jnp.sqrt(jnp.float32(fan_in))
    return {
        "memory": jax.random.normal(ks[0], (num_nodes, mem_dim), jnp.float32),
        "last_update": jax.random.uniform(ks[1], (num_nodes,), jnp.float32,
                                          0.0, 50.0),
        "gnn": {
            "w_time": jax.random.normal(ks[2], (1, time_dim), jnp.float32),
            "w_self": jax.random.normal(ks[3], (z_dim, hid_dim)) * scale(z_dim),
            "w_nz": jax.random.normal(ks[4], (z_dim, hid_dim)) * scale(z_dim),
            "w_nm": jax.random.normal(ks[5], (msg_dim, hid_dim)) * scale(msg_dim),
            "w_nt": jax.random.normal(ks[6], (time_dim, hid_dim)) * scale(time_dim),
            "b": jnp.zeros((1, hid_dim), jnp.float32),
        },
        "readout": {
            "w1": jax.random.normal(ks[7], (hid_dim, ro_hid)) * scale(hid_dim),
            "w2": jax.random.normal(ks[8], (hid_dim, ro_hid)) * scale(hid_dim),
            "b1": jnp.zeros((1, ro_hid), jnp.float32),
            "w3": jax.random.normal(ks[9], (ro_hid, 1)) * scale(ro_hid),
            "b3": jnp.zeros((1, 1), jnp.float32),
        },
    }


def pack_tgat_params(params):
    """One-time weight stacking so the kernel runs fewer, deeper matmuls."""
    g, r = params["gnn"], params["readout"]
    ro_hid = r["w3"].shape[0]
    w3_pad = jnp.zeros((ro_hid, LANES), jnp.float32).at[:, 0:1].set(r["w3"])
    b3_pad = jnp.zeros((1, LANES), jnp.float32).at[:, 0:1].set(r["b3"])
    return {
        "w_time": g["w_time"],
        # rows: [W_self ; W_nz ; W_nm ; W_nt]  -> matches [z | agg_z | agg_m | agg_t]
        "w_gnn": jnp.concatenate([g["w_self"], g["w_nz"], g["w_nm"], g["w_nt"]],
                                 axis=0),
        "b_gnn": g["b"],
        # rows: [W1 ; W2] -> matches [z_src | z_dst]  (K = 2*HID = 128)
        "w12": jnp.concatenate([r["w1"], r["w2"]], axis=0),
        "b1": r["b1"],
        "w3_pad": w3_pad,
        "b3_pad": b3_pad,
    }


# ----------------------------------------------------------------------------
# Pure-JAX reference (mirrors the original un-fused math) for verification
# ----------------------------------------------------------------------------
def tgat_reference(params, batch, n_id, msg, t, edge_index, id_mapper):
    hp = jax.lax.Precision.HIGHEST
    dot = lambda a, b: jnp.dot(a, b, precision=hp)
    m = params["memory"][n_id]
    lu = params["last_update"][n_id]
    x = batch.x[0] if batch.x.ndim == 3 else batch.x
    z = jnp.concatenate([m, x[n_id]], axis=-1)
    n_local, e = n_id.shape[0], edge_index.shape[1]
    src_l, dst_l = edge_index[0], edge_index[1]
    deg = jnp.zeros((n_local,), jnp.float32).at[dst_l].add(1.0)
    inv = 1.0 / jnp.maximum(deg, 1.0)
    a = jnp.zeros((n_local, n_local), jnp.float32).at[dst_l, src_l].add(inv[dst_l])
    s = jnp.zeros((n_local, e), jnp.float32).at[dst_l, jnp.arange(e)].set(inv[dst_l])
    rel_t = (t.astype(jnp.float32) - lu[dst_l])[:, None]
    g = params["gnn"]
    te = jnp.cos(rel_t * g["w_time"])
    h = jax.nn.relu(dot(z, g["w_self"]) + dot(dot(a, z), g["w_nz"])
                    + dot(dot(s, msg), g["w_nm"]) + dot(dot(s, te), g["w_nt"])
                    + g["b"])
    r = params["readout"]

    def ro(hs, hd):
        hid = jax.nn.relu(dot(hs, r["w1"]) + dot(hd, r["w2"]) + r["b1"])
        return dot(hid, r["w3"]) + r["b3"]

    zs = h[id_mapper[batch.src]]
    zp = h[id_mapper[batch.dst]]
    zn = h[id_mapper[batch.neg_dst]]
    return ro(zs, zp), ro(zs, zn)


if __name__ == "__main__":
    NUM_NODES = 40    # global node count
    N_LOCAL = 16      # nodes in the sampled subgraph (len(n_id))
    MEM = 32          # memory dim
    FEAT = 32         # raw node feature dim
    HID = 64          # gnn output dim
    MSG = 16          # edge message dim
    TDIM = 16         # time-encoding dim
    ROH = 32          # readout hidden dim
    B = 8             # events in the batch
    E = 24            # edges in the sampled subgraph

    key = jax.random.PRNGKey(0)
    k_par, k_nid, k_x, k_msg, k_t, k_e, k_b = jax.random.split(key, 7)

    params = make_params(k_par, NUM_NODES, MEM, FEAT, HID, MSG, TDIM, ROH)
    packed = pack_tgat_params(params)

    # sampled subgraph node ids (global) and id_mapper global->local
    n_id = jax.random.permutation(k_nid, NUM_NODES)[:N_LOCAL]
    id_mapper = jnp.zeros((NUM_NODES,), jnp.int32).at[n_id].set(
        jnp.arange(N_LOCAL, dtype=jnp.int32))

    # batch of temporal events; src/dst/neg_dst drawn from n_id
    kb1, kb2, kb3 = jax.random.split(k_b, 3)
    batch = types.SimpleNamespace(
        src=n_id[jax.random.randint(kb1, (B,), 0, N_LOCAL)],
        dst=n_id[jax.random.randint(kb2, (B,), 0, N_LOCAL)],
        neg_dst=n_id[jax.random.randint(kb3, (B,), 0, N_LOCAL)],
        x=jax.random.normal(k_x, (NUM_NODES, FEAT), jnp.float32),
    )

    # subgraph edges (local indices into n_id), edge messages and times
    ke1, ke2 = jax.random.split(k_e)
    edge_index = jnp.stack([
        jax.random.randint(ke1, (E,), 0, N_LOCAL),
        jax.random.randint(ke2, (E,), 0, N_LOCAL),
    ]).astype(jnp.int32)
    msg = jax.random.normal(k_msg, (E, MSG), jnp.float32)
    t = jax.random.uniform(k_t, (E,), jnp.float32, 0.0, 100.0)

    pos_out, neg_out, m_src, m_dst = tgat_forward(
        params, packed, batch, n_id, msg, t, edge_index, id_mapper)
    jax.block_until_ready((pos_out, neg_out, m_src, m_dst))

    assert pos_out.shape == (B, 1) and neg_out.shape == (B, 1)
    assert m_src.shape == (B, MEM) and m_dst.shape == (B, MEM)

    ref_pos, ref_neg = tgat_reference(params, batch, n_id, msg, t,
                                      edge_index, id_mapper)
    err = max(float(jnp.max(jnp.abs(pos_out - ref_pos))),
              float(jnp.max(jnp.abs(neg_out - ref_neg))))
    assert err < 5e-2, f"fused kernel mismatch vs reference: max |err| = {err}"
    print("KERNEL_OK")
</pallas_src>

<mosaic_0001>
module attributes {stable_mosaic.version = 11 : i64} {
  func.func @kernel(%arg0: memref<16x64xf32, #tpu.memory_space<vmem>>, %arg1: memref<24x16xf32, #tpu.memory_space<vmem>>, %arg2: memref<24x1xf32, #tpu.memory_space<vmem>>, %arg3: memref<1x16xf32, #tpu.memory_space<vmem>>, %arg4: memref<1x24xi32, #tpu.memory_space<vmem>>, %arg5: memref<24x1xi32, #tpu.memory_space<vmem>>, %arg6: memref<24x1xi32, #tpu.memory_space<vmem>>, %arg7: memref<24x1xi32, #tpu.memory_space<vmem>>, %arg8: memref<1x16xf32, #tpu.memory_space<vmem>>, %arg9: memref<160x64xf32, #tpu.memory_space<vmem>>, %arg10: memref<1x64xf32, #tpu.memory_space<vmem>>, %arg11: memref<128x32xf32, #tpu.memory_space<vmem>>, %arg12: memref<1x32xf32, #tpu.memory_space<vmem>>, %arg13: memref<32x128xf32, #tpu.memory_space<vmem>>, %arg14: memref<1x128xf32, #tpu.memory_space<vmem>>, %arg15: memref<16x128xf32, #tpu.memory_space<vmem>>) attributes {dimension_semantics = [], scalar_prefetch = 0 : i64, scratch_operands = 0 : i64, tpu.core_type = #tpu.core_type<tc>} {
    %c0 = arith.constant 0 : index
    %c0_0 = arith.constant 0 : index
    %0 = vector.load %arg0[%c0, %c0_0] : memref<16x64xf32, #tpu.memory_space<vmem>>, vector<16x64xf32>
    %1 = tpu.iota {dimensions = array<i32: 0>} : vector<16x24xi32>
    %c0_1 = arith.constant 0 : index
    %c0_2 = arith.constant 0 : index
    %2 = vector.load %arg4[%c0_1, %c0_2] : memref<1x24xi32, #tpu.memory_space<vmem>>, vector<1x24xi32>
    %3 = vector.broadcast %2 : vector<1x24xi32> to vector<16x24xi32>
    %4 = arith.cmpi eq, %1, %3 : vector<16x24xi32>
    %5 = arith.extui %4 : vector<16x24xi1> to vector<16x24xi32>
    %6 = arith.sitofp %5 : vector<16x24xi32> to vector<16x24xf32>
    %cst = arith.constant dense<0.000000e+00> : vector<16xf32>
    %7 = vector.multi_reduction <add>, %6, %cst [1] : vector<16x24xf32> to vector<16xf32>
    %8 = vector.shape_cast %7 : vector<16xf32> to vector<16x1xf32>
    %cst_3 = arith.constant 1.000000e+00 : f32
    %9 = vector.broadcast %cst_3 : f32 to vector<16x1xf32>
    %10 = arith.maximumf %8, %9 : vector<16x1xf32>
    %cst_4 = arith.constant 1.000000e+00 : f32
    %11 = vector.broadcast %cst_4 : f32 to vector<16x1xf32>
    %12 = arith.divf %11, %10 : vector<16x1xf32>
    %13 = vector.broadcast %12 : vector<16x1xf32> to vector<16x24xf32>
    %14 = arith.mulf %6, %13 : vector<16x24xf32>
    %15 = tpu.iota {dimensions = array<i32: 1>} : vector<24x16xi32>
    %c0_5 = arith.constant 0 : index
    %c0_6 = arith.constant 0 : index
    %16 = vector.load %arg6[%c0_5, %c0_6] : memref<24x1xi32, #tpu.memory_space<vmem>>, vector<24x1xi32>
    %17 = vector.broadcast %16 : vector<24x1xi32> to vector<24x16xi32>
    %18 = arith.cmpi eq, %15, %17 : vector<24x16xi32>
    %19 = arith.extui %18 : vector<24x16xi1> to vector<24x16xi32>
    %20 = arith.sitofp %19 : vector<24x16xi32> to vector<24x16xf32>
    %c0_7 = arith.constant 0 : index
    %c0_8 = arith.constant 0 : index
    %21 = vector.load %arg5[%c0_7, %c0_8] : memref<24x1xi32, #tpu.memory_space<vmem>>, vector<24x1xi32>
    %22 = vector.broadcast %21 : vector<24x1xi32> to vector<24x16xi32>
    %23 = arith.cmpi eq, %15, %22 : vector<24x16xi32>
    %24 = arith.extui %23 : vector<24x16xi1> to vector<24x16xi32>
    %25 = arith.sitofp %24 : vector<24x16xi32> to vector<24x16xf32>
    %c0_9 = arith.constant 0 : index
    %c0_10 = arith.constant 0 : index
    %26 = vector.load %arg3[%c0_9, %c0_10] : memref<1x16xf32, #tpu.memory_space<vmem>>, vector<1x16xf32>
    %27 = vector.broadcast %26 : vector<1x16xf32> to vector<24x16xf32>
    %28 = arith.mulf %25, %27 : vector<24x16xf32>
    %cst_11 = arith.constant dense<0.000000e+00> : vector<24xf32>
    %29 = vector.multi_reduction <add>, %28, %cst_11 [1] : vector<24x16xf32> to vector<24xf32>
    %30 = vector.shape_cast %29 : vector<24xf32> to vector<24x1xf32>
    %c0_12 = arith.constant 0 : index
    %c0_13 = arith.constant 0 : index
    %31 = vector.load %arg2[%c0_12, %c0_13] : memref<24x1xf32, #tpu.memory_space<vmem>>, vector<24x1xf32>
    %32 = arith.subf %31, %30 : vector<24x1xf32>
    %c0_14 = arith.constant 0 : index
    %c0_15 = arith.constant 0 : index
    %33 = vector.load %arg8[%c0_14, %c0_15] : memref<1x16xf32, #tpu.memory_space<vmem>>, vector<1x16xf32>
    %34 = vector.broadcast %32 : vector<24x1xf32> to vector<24x16xf32>
    %35 = vector.broadcast %33 : vector<1x16xf32> to vector<24x16xf32>
    %36 = arith.mulf %34, %35 : vector<24x16xf32>
    %37 = math.cos %36 : vector<24x16xf32>
    %cst_16 = arith.constant dense<0.000000e+00> : vector<24x64xf32>
    %38 = tpu.matmul %20, %0, %cst_16 {dimension_numbers = #tpu.dot_dimension_numbers<[1], [0], [0], [1], [0, 0, 1, 1], [], []>} : vector<24x16xf32>, vector<16x64xf32>, vector<24x64xf32> -> vector<24x64xf32>
    %c0_17 = arith.constant 0 : index
    %c0_18 = arith.constant 0 : index
    %39 = vector.load %arg1[%c0_17, %c0_18] : memref<24x16xf32, #tpu.memory_space<vmem>>, vector<24x16xf32>
    %40 = tpu.concatenate %38, %39, %37 in 1 : vector<24x64xf32>, vector<24x16xf32>, vector<24x16xf32> -> vector<24x96xf32>
    %cst_19 = arith.constant dense<0.000000e+00> : vector<16x96xf32>
    %41 = tpu.matmul %14, %40, %cst_19 {dimension_numbers = #tpu.dot_dimension_numbers<[1], [0], [0], [1], [0, 0, 1, 1], [], []>} : vector<16x24xf32>, vector<24x96xf32>, vector<16x96xf32> -> vector<16x96xf32>
    %42 = tpu.concatenate %0, %41 in 1 : vector<16x64xf32>, vector<16x96xf32> -> vector<16x160xf32>
    %c0_20 = arith.constant 0 : index
    %c0_21 = arith.constant 0 : index
    %43 = vector.load %arg9[%c0_20, %c0_21] : memref<160x64xf32, #tpu.memory_space<vmem>>, vector<160x64xf32>
    %cst_22 = arith.constant dense<0.000000e+00> : vector<16x64xf32>
    %44 = tpu.matmul %42, %43, %cst_22 {dimension_numbers = #tpu.dot_dimension_numbers<[1], [0], [0], [1], [0, 0, 1, 1], [], []>} : vector<16x160xf32>, vector<160x64xf32>, vector<16x64xf32> -> vector<16x64xf32>
    %c0_23 = arith.constant 0 : index
    %c0_24 = arith.constant 0 : index
    %45 = vector.load %arg10[%c0_23, %c0_24] : memref<1x64xf32, #tpu.memory_space<vmem>>, vector<1x64xf32>
    %46 = vector.broadcast %45 : vector<1x64xf32> to vector<16x64xf32>
    %47 = arith.addf %44, %46 : vector<16x64xf32>
    %cst_25 = arith.constant 0.000000e+00 : f32
    %48 = vector.broadcast %cst_25 : f32 to vector<16x64xf32>
    %49 = arith.maximumf %47, %48 : vector<16x64xf32>
    %50 = tpu.iota {dimensions = array<i32: 1>} : vector<24x16xi32>
    %c0_26 = arith.constant 0 : index
    %c0_27 = arith.constant 0 : index
    %51 = vector.load %arg7[%c0_26, %c0_27] : memref<24x1xi32, #tpu.memory_space<vmem>>, vector<24x1xi32>
    %52 = vector.broadcast %51 : vector<24x1xi32> to vector<24x16xi32>
    %53 = arith.cmpi eq, %50, %52 : vector<24x16xi32>
    %54 = arith.extui %53 : vector<24x16xi1> to vector<24x16xi32>
    %55 = arith.sitofp %54 : vector<24x16xi32> to vector<24x16xf32>
    %cst_28 = arith.constant dense<0.000000e+00> : vector<24x64xf32>
    %56 = tpu.matmul %55, %49, %cst_28 {dimension_numbers = #tpu.dot_dimension_numbers<[1], [0], [0], [1], [0, 0, 1, 1], [], []>} : vector<24x16xf32>, vector<16x64xf32>, vector<24x64xf32> -> vector<24x64xf32>
    %57 = vector.extract_strided_slice %56 {offsets = [0, 0], sizes = [8, 64], strides = [1, 1]} : vector<24x64xf32> to vector<8x64xf32>
    %58 = vector.extract_strided_slice %56 {offsets = [8, 0], sizes = [8, 64], strides = [1, 1]} : vector<24x64xf32> to vector<8x64xf32>
    %59 = vector.extract_strided_slice %56 {offsets = [16, 0], sizes = [8, 64], strides = [1, 1]} : vector<24x64xf32> to vector<8x64xf32>
    %60 = tpu.concatenate %57, %58 in 1 : vector<8x64xf32>, vector<8x64xf32> -> vector<8x128xf32>
    %61 = tpu.concatenate %57, %59 in 1 : vector<8x64xf32>, vector<8x64xf32> -> vector<8x128xf32>
    %62 = tpu.concatenate %60, %61 in 0 : vector<8x128xf32>, vector<8x128xf32> -> vector<16x128xf32>
    %c0_29 = arith.constant 0 : index
    %c0_30 = arith.constant 0 : index
    %63 = vector.load %arg11[%c0_29, %c0_30] : memref<128x32xf32, #tpu.memory_space<vmem>>, vector<128x32xf32>
    %cst_31 = arith.constant dense<0.000000e+00> : vector<16x32xf32>
    %64 = tpu.matmul %62, %63, %cst_31 {dimension_numbers = #tpu.dot_dimension_numbers<[1], [0], [0], [1], [0, 0, 1, 1], [], []>} : vector<16x128xf32>, vector<128x32xf32>, vector<16x32xf32> -> vector<16x32xf32>
    %c0_32 = arith.constant 0 : index
    %c0_33 = arith.constant 0 : index
    %65 = vector.load %arg12[%c0_32, %c0_33] : memref<1x32xf32, #tpu.memory_space<vmem>>, vector<1x32xf32>
    %66 = vector.broadcast %65 : vector<1x32xf32> to vector<16x32xf32>
    %67 = arith.addf %64, %66 : vector<16x32xf32>
    %cst_34 = arith.constant 0.000000e+00 : f32
    %68 = vector.broadcast %cst_34 : f32 to vector<16x32xf32>
    %69 = arith.maximumf %67, %68 : vector<16x32xf32>
    %c0_35 = arith.constant 0 : index
    %c0_36 = arith.constant 0 : index
    %70 = vector.load %arg13[%c0_35, %c0_36] : memref<32x128xf32, #tpu.memory_space<vmem>>, vector<32x128xf32>
    %cst_37 = arith.constant dense<0.000000e+00> : vector<16x128xf32>
    %71 = tpu.matmul %69, %70, %cst_37 {dimension_numbers = #tpu.dot_dimension_numbers<[1], [0], [0], [1], [0, 0, 1, 1], [], []>} : vector<16x32xf32>, vector<32x128xf32>, vector<16x128xf32> -> vector<16x128xf32>
    %c0_38 = arith.constant 0 : index
    %c0_39 = arith.constant 0 : index
    %72 = vector.load %arg14[%c0_38, %c0_39] : memref<1x128xf32, #tpu.memory_space<vmem>>, vector<1x128xf32>
    %73 = vector.broadcast %72 : vector<1x128xf32> to vector<16x128xf32>
    %74 = arith.addf %71, %73 : vector<16x128xf32>
    %c0_40 = arith.constant 0 : index
    %c0_41 = arith.constant 0 : index
    %75 = vector.load %arg15[%c0_40, %c0_41] : memref<16x128xf32, #tpu.memory_space<vmem>>, vector<16x128xf32>
    tpu.vector_store %arg15[%c0_40, %c0_41], %74 {strides = array<i32>} : memref<16x128xf32, #tpu.memory_space<vmem>>, vector<16x128xf32>,
    return
  }
}

</mosaic_0001>

<llo_original>
// kernel: tpu_custom_call.1
$region0: #{tpu_custom_call.1}
  #allocation0 [shape = 'u32[]', space=smem, size = 0x4, offset = 0x4, fixed_abs, tag = 'smem constant byte address 0x4 - core index']
  #allocation1 [shape = 'u32[144,128]{1,0:T(1,128)}', space=vmem, size = 0x12000, scoped, tag = 'internal scratch']
  %s0 = inlined_call_operand.vmem [shape: f32[16,64], index: 0, kind: input, shape index: {}]
  %s1 = inlined_call_operand.vmem [shape: f32[24,16], index: 1, kind: input, shape index: {}]
  %s2 = inlined_call_operand.vmem [shape: f32[24,1], index: 2, kind: input, shape index: {}]
  %s3 = inlined_call_operand.vmem [shape: f32[1,16], index: 3, kind: input, shape index: {}]
  %s4 = inlined_call_operand.vmem [shape: s32[1,24], index: 4, kind: input, shape index: {}]
  %s5 = inlined_call_operand.vmem [shape: s32[24,1], index: 5, kind: input, shape index: {}]
  %s6 = inlined_call_operand.vmem [shape: s32[24,1], index: 6, kind: input, shape index: {}]
  %s7 = inlined_call_operand.vmem [shape: s32[24,1], index: 7, kind: input, shape index: {}]
  %s8 = inlined_call_operand.vmem [shape: f32[1,16], index: 8, kind: input, shape index: {}]
  %s9 = inlined_call_operand.vmem [shape: f32[160,64], index: 9, kind: input, shape index: {}]
  %s10 = inlined_call_operand.vmem [shape: f32[1,64], index: 10, kind: input, shape index: {}]
  %s11 = inlined_call_operand.vmem [shape: f32[128,32], index: 11, kind: input, shape index: {}]
  %s12 = inlined_call_operand.vmem [shape: f32[1,32], index: 12, kind: input, shape index: {}]
  %s13 = inlined_call_operand.vmem [shape: f32[32,128], index: 13, kind: input, shape index: {}]
  %s14 = inlined_call_operand.vmem [shape: f32[1,128], index: 14, kind: input, shape index: {}]
  %s15 = inlined_call_operand.hbm [shape: f32[16,128], index: 15, kind: output, shape index: {}]
  %s16 = sld [smem:[#allocation0]]
  $region70: #{tpu_custom_call.1} parent=0
    _
  %s18 = ssub.s32 1, %s16
  %s19 = scalar_select 0, %s18, %s16
  $region1: #{tpu_custom_call.1} parent=0
    #allocation2 [shape = 'u8[8192]{0}', space=vmem, size = 0x2000, scoped, tag = 'output window, operand 0, single buffered']
    #allocation3 [shape = 's32[1]{0}', space=sflag, size = 0x4, scoped, tag = 'scoped memory for tpu_custom_call.1']
    %20 = vsyncpa [#allocation3], 0
    // Predicated region
    $region2: #{tpu_custom_call.1} parent=1 // pred_check
      _
    $region3: #{tpu_custom_call.1} parent=1 // pred_check_branch
      %22 = sbr.rel (0) target = $region5
    $region4: #{tpu_custom_call.1} parent=1 // pred_region
      _
    $region5: #{tpu_custom_call.1} parent=1 // pred_fallthru
      _
    // Predicated region
    $region6: #{tpu_custom_call.1} parent=1 // pred_check
      _
    $region7: #{tpu_custom_call.1} parent=1 // pred_check_branch
      %24 = sbr.rel (0) target = $region9
    $region8: #{tpu_custom_call.1} parent=1 // pred_region
      _
    $region9: #{tpu_custom_call.1} parent=1 // pred_fallthru
      _
    // Predicated region
    $region10: #{tpu_custom_call.1} parent=1 // pred_check
      _
    $region11: #{tpu_custom_call.1} parent=1 // pred_check_branch
      %26 = sbr.rel (0) target = $region13
    $region12: #{tpu_custom_call.1} parent=1 // pred_region
      _
    $region13: #{tpu_custom_call.1} parent=1 // pred_fallthru
      _
    // Predicated region
    $region14: #{tpu_custom_call.1} parent=1 // pred_check
      _
    $region15: #{tpu_custom_call.1} parent=1 // pred_check_branch
      %28 = sbr.rel (0) target = $region17
    $region16: #{tpu_custom_call.1} parent=1 // pred_region
      _
    $region17: #{tpu_custom_call.1} parent=1 // pred_fallthru
      _
    // Predicated region
    $region18: #{tpu_custom_call.1} parent=1 // pred_check
      _
    $region19: #{tpu_custom_call.1} parent=1 // pred_check_branch
      %30 = sbr.rel (0) target = $region21
    $region20: #{tpu_custom_call.1} parent=1 // pred_region
      _
    $region21: #{tpu_custom_call.1} parent=1 // pred_fallthru
      _
    // Predicated region
    $region22: #{tpu_custom_call.1} parent=1 // pred_check
      _
    $region23: #{tpu_custom_call.1} parent=1 // pred_check_branch
      %32 = sbr.rel (0) target = $region25
    $region24: #{tpu_custom_call.1} parent=1 // pred_region
      _
    $region25: #{tpu_custom_call.1} parent=1 // pred_fallthru
      _
    // Predicated region
    $region26: #{tpu_custom_call.1} parent=1 // pred_check
      _
    $region27: #{tpu_custom_call.1} parent=1 // pred_check_branch
      %34 = sbr.rel (0) target = $region29
    $region28: #{tpu_custom_call.1} parent=1 // pred_region
      _
    $region29: #{tpu_custom_call.1} parent=1 // pred_fallthru
      _
    // Predicated region
    $region30: #{tpu_custom_call.1} parent=1 // pred_check
      _
    $region31: #{tpu_custom_call.1} parent=1 // pred_check_branch
      %36 = sbr.rel (0) target = $region33
    $region32: #{tpu_custom_call.1} parent=1 // pred_region
      _
    $region33: #{tpu_custom_call.1} parent=1 // pred_fallthru
      _
    // Predicated region
    $region34: #{tpu_custom_call.1} parent=1 // pred_check
      _
    $region35: #{tpu_custom_call.1} parent=1 // pred_check_branch
      %38 = sbr.rel (0) target = $region37
    $region36: #{tpu_custom_call.1} parent=1 // pred_region
      _
    $region37: #{tpu_custom_call.1} parent=1 // pred_fallthru
      _
    // Predicated region
    $region38: #{tpu_custom_call.1} parent=1 // pred_check
      _
    $region39: #{tpu_custom_call.1} parent=1 // pred_check_branch
      %40 = sbr.rel (0) target = $region41
    $region40: #{tpu_custom_call.1} parent=1 // pred_region
      _
    $region41: #{tpu_custom_call.1} parent=1 // pred_fallthru
      _
    // Predicated region
    $region42: #{tpu_custom_call.1} parent=1 // pred_check
      _
    $region43: #{tpu_custom_call.1} parent=1 // pred_check_branch
      %42 = sbr.rel (0) target = $region45
    $region44: #{tpu_custom_call.1} parent=1 // pred_region
      _
    $region45: #{tpu_custom_call.1} parent=1 // pred_fallthru
      _
    // Predicated region
    $region46: #{tpu_custom_call.1} parent=1 // pred_check
      _
    $region47: #{tpu_custom_call.1} parent=1 // pred_check_branch
      %44 = sbr.rel (0) target = $region49
    $region48: #{tpu_custom_call.1} parent=1 // pred_region
      _
    $region49: #{tpu_custom_call.1} parent=1 // pred_fallthru
      _
    // Predicated region
    $region50: #{tpu_custom_call.1} parent=1 // pred_check
      _
    $region51: #{tpu_custom_call.1} parent=1 // pred_check_branch
      %46 = sbr.rel (0) target = $region53
    $region52: #{tpu_custom_call.1} parent=1 // pred_region
      _
    $region53: #{tpu_custom_call.1} parent=1 // pred_fallthru
      _
    // Predicated region
    $region54: #{tpu_custom_call.1} parent=1 // pred_check
      _
    $region55: #{tpu_custom_call.1} parent=1 // pred_check_branch
      %48 = sbr.rel (0) target = $region57
    $region56: #{tpu_custom_call.1} parent=1 // pred_region
      _
    $region57: #{tpu_custom_call.1} parent=1 // pred_fallthru
      _
    // Predicated region
    $region58: #{tpu_custom_call.1} parent=1 // pred_check
      _
    $region59: #{tpu_custom_call.1} parent=1 // pred_check_branch
      %50 = sbr.rel (0) target = $region61
    $region60: #{tpu_custom_call.1} parent=1 // pred_region
      _
    $region61: #{tpu_custom_call.1} parent=1 // pred_fallthru
      _
    %v51 = vld [vmem:[%s0] sm:$0xff]
    %v52 = vld [vmem:[%s0 + $0x8] sm:$0xff]
    %v53 = vlaneseq
    %v54 = vshrl.u32 %v53, 7
    %v55 = vadd.s32 %v54, 8
    %v56 = vld [vmem:[%s4] sm:$0x1]
    %v57 = vlaneseq
    %v58 = vshrl.u32 %v57, 7
    %v59 = vsub.s32 0, %v58
    %v60 = vrot.slane %v56, %v59
    %vm61 = vcmp.eq.s32.totalorder %v54, %v60
    %vm62 = vcmp.eq.s32.totalorder %v55, %v60
    %v63 = vsel %vm61, 1, 0
    %v64 = vsel %vm62, 1, 0
    %v65 = vcvt.s32.f32 %v63
    %v66 = vcvt.s32.f32 %v64
    %vm67 = vcmask 195584
    %v68 = vsel %vm67, %v65, 0.0
    %69 = vadd.xlane.f32.xlu0 %v68
    %v70 = vpop.xlane.xlu0 %69
    %v71 = vsel %vm67, %v66, 0.0
    %72 = vadd.xlane.f32.xlu0 %v71
    %v73 = vpop.xlane.xlu0 %72
    %v74 = vmax.f32 %v70, 1.0
    %v75 = vmax.f32 %v73, 1.0
    %v76 = vrcp.pop %v74
    %v77 = vmul.f32 1.0, %v76
    %v78 = vrcp.pop %v75
    %v79 = vmul.f32 1.0, %v78
    %v80 = vmul.f32 %v65, %v77
    %v81 = vmul.f32 %v66, %v79
    %v82 = vlaneseq
    %v83 = vand.u32 %v82, 127
    %v84 = vld [vmem:[%s6] sm:$0xff]
    %v85 = vld [vmem:[%s6 + $0x8] sm:$0xff]
    %v86 = vld [vmem:[%s6 + $0x10] sm:$0xff]
    %87 = vset.pattern.permute.xlu0 0
    %88 = vperm.xlu0 %87, %v84
    %v89 = vpop.permute.xlu0 %88
    %90 = vset.pattern.permute.xlu0 0
    %91 = vperm.xlu0 %90, %v85
    %v92 = vpop.permute.xlu0 %91
    %93 = vset.pattern.permute.xlu0 0
    %94 = vperm.xlu0 %93, %v86
    %v95 = vpop.permute.xlu0 %94
    %vm96 = vcmp.eq.s32.totalorder %v83, %v89
    %vm97 = vcmp.eq.s32.totalorder %v83, %v92
    %vm98 = vcmp.eq.s32.totalorder %v83, %v95
    %v99 = vsel %vm96, 1, 0
    %v100 = vsel %vm97, 1, 0
    %v101 = vsel %vm98, 1, 0
    %v102 = vcvt.s32.f32 %v99
    %v103 = vcvt.s32.f32 %v100
    %v104 = vcvt.s32.f32 %v101
    %v105 = vld [vmem:[%s5] sm:$0xff]
    %v106 = vld [vmem:[%s5 + $0x8] sm:$0xff]
    %v107 = vld [vmem:[%s5 + $0x10] sm:$0xff]
    %108 = vset.pattern.permute.xlu0 0
    %109 = vperm.xlu0 %108, %v105
    %v110 = vpop.permute.xlu0 %109
    %111 = vset.pattern.permute.xlu0 0
    %112 = vperm.xlu0 %111, %v106
    %v113 = vpop.permute.xlu0 %112
    %114 = vset.pattern.permute.xlu0 0
    %115 = vperm.xlu0 %114, %v107
    %v116 = vpop.permute.xlu0 %115
    %vm117 = vcmp.eq.s32.totalorder %v83, %v110
    %vm118 = vcmp.eq.s32.totalorder %v83, %v113
    %vm119 = vcmp.eq.s32.totalorder %v83, %v116
    %v120 = vsel %vm117, 1, 0
    %v121 = vsel %vm118, 1, 0
    %v122 = vsel %vm119, 1, 0
    %v123 = vcvt.s32.f32 %v120
    %v124 = vcvt.s32.f32 %v121
    %v125 = vcvt.s32.f32 %v122
    %v126 = vld [vmem:[%s3] sm:$0x1]
    %v128 = vlaneseq
    %v129 = vshrl.u32 %v128, 7
    %v130 = vsub.s32 0, %v129
    %v131 = vrot.slane %v126, %v130
    %v133 = vmul.f32 %v123, %v131
    %v134 = vmul.f32 %v124, %v131
    %v135 = vmul.f32 %v125, %v131
    %vm136 = vcmask 130048
    %v137 = vsel %vm136, %v133, 0.0
    %138 = vadd.xlane.f32.xlu0 %v137
    %v139 = vpop.xlane.xlu0 %138
    %v140 = vsel %vm136, %v134, 0.0
    %141 = vadd.xlane.f32.xlu0 %v140
    %v142 = vpop.xlane.xlu0 %141
    %v143 = vsel %vm136, %v135, 0.0
    %144 = vadd.xlane.f32.xlu0 %v143
    %v145 = vpop.xlane.xlu0 %144
    %v146 = vld [vmem:[%s2] sm:$0xff]
    %v147 = vld [vmem:[%s2 + $0x8] sm:$0xff]
    %v148 = vld [vmem:[%s2 + $0x10] sm:$0xff]
    %v149 = vsub.f32 %v146, %v139
    %v150 = vsub.f32 %v147, %v142
    %v151 = vsub.f32 %v148, %v145
    %v152 = vld [vmem:[%s8] sm:$0x1]
    %154 = vset.pattern.permute.xlu0 0
    %155 = vperm.xlu0 %154, %v149
    %v156 = vpop.permute.xlu0 %155
    %159 = vset.pattern.permute.xlu0 0
    %160 = vperm.xlu0 %159, %v150
    %v161 = vpop.permute.xlu0 %160
    %164 = vset.pattern.permute.xlu0 0
    %165 = vperm.xlu0 %164, %v151
    %v166 = vpop.permute.xlu0 %165
    %v169 = vlaneseq
    %v170 = vshrl.u32 %v169, 7
    %v171 = vsub.s32 0, %v170
    %v172 = vrot.slane %v152, %v171
    %v174 = vmul.f32 %v156, %v172
    %v175 = vmul.f32 %v161, %v172
    %v176 = vmul.f32 %v166, %v172
    %v177 = vand.u32 2147483647, %v174
    %vm178 = vcmp.le.f32.partialorder %v177, 0.7853982
    %vm179 = vcmp.lt.s32.totalorder %v174, 0
    %v180 = vand.u32 %v174, 2139095040
    %v181 = vshrl.u32 %v180, 23
    %v182 = vsub.s32 %v181, 127
    %v183 = vand.u32 2147483647, %v174
    %v184 = vand.u32 %v183, 8388607
    %v185 = vor.u32 %v184, 8388608
    %v186 = vsub.s32 0, %v185
    %v187 = vadd.s32 %v182, 1
    %vm188 = vcmp.gt.s32.totalorder %v187, 0
    %v189 = vsel %vm188, %v187, 0
    %v190 = vshrl.u32 %v189, 5
    %v191 = vand.u32 %v189, 31
    %v192 = vsub.s32 32, %v191
    %v193 = vshrl.u32 683565275, %v192
    %v194 = vshll.u32 683565275, %v191
    %v195 = vshrl.u32 2475754826, %v192
    %v196 = vor.u32 %v194, %v195
    %v197 = vshll.u32 2475754826, %v191
    %v198 = vshrl.u32 2131351028, %v192
    %v199 = vor.u32 %v197, %v198
    %v200 = vshll.u32 2131351028, %v191
    %v201 = vshrl.u32 2102212464, %v192
    %v202 = vor.u32 %v200, %v201
    %v203 = vshll.u32 2102212464, %v191
    %v204 = vshrl.u32 920167782, %v192
    %v205 = vor.u32 %v203, %v204
    %v206 = vshll.u32 920167782, %v191
    %v207 = vshrl.u32 1326507024, %v192
    %v208 = vor.u32 %v206, %v207
    %vm209 = vcmp.lt.s32.totalorder %v190, 1
    %vm210 = vcmp.lt.s32.totalorder %v190, 2
    %vm211 = vcmp.lt.s32.totalorder %v190, 3
    %vm212 = vcmp.lt.s32.totalorder %v190, 4
    %v213 = vsel %vm209, %v193, %v196
    %v214 = vsel %vm212, %v202, 2102212464
    %v215 = vsel %vm211, %v199, %v214
    %v216 = vsel %vm210, %v213, %v215
    %v217 = vsel %vm209, %v196, %v199
    %v218 = vsel %vm212, %v205, 920167782
    %v219 = vsel %vm211, %v202, %v218
    %v220 = vsel %vm210, %v217, %v219
    %v221 = vsel %vm209, %v199, %v202
    %v222 = vsel %vm212, %v208, 1326507024
    %v223 = vsel %vm211, %v205, %v222
    %v224 = vsel %vm210, %v221, %v223
    %v225 = vshll.u32 %v185, 8
    %v226 = vmul.u32.u64.compose %v225, %v224
    %v227 = vextract.low.u32 %v226
    %v228 = vextract.high.u32 %v226
    %v229 = vmul.u32.u64.compose %v225, %v220
    %v230 = vextract.low.u32 %v229
    %v231 = vextract.high.u32 %v229
    %v232 = vmul.u32 %v225, %v216
    %v233 = vadd.s32 %v228, %v230
    %vm234 = vc.u32 %v228, %v230
    %v235 = vadd.s32 %v231, 1
    %v236 = vsel %vm234, %v235, %v231
    %v237 = vadd.s32 %v232, %v236
    %v238 = vadd.s32 %v237, 536870912
    %v239 = vshrl.u32 %v238, 30
    %v240 = vshll.u32 %v239, 30
    %v241 = vsub.s32 %v237, %v240
    %vm242 = vcmp.lt.s32.totalorder %v241, 0
    %v243 = vsub.s32 0, %v241
    %v244 = vsel %vm242, %v243, %v241
    %v245 = vclz %v244
    %v246 = vsub.s32 %v245, 2
    %vm247 = vcmp.gt.s32.totalorder 0, %v246
    %v248 = vsel %vm247, 0, %v246
    %v249 = vsub.s32 32, %v248
    %v250 = vshll.u32 %v241, %v248
    %v251 = vshrl.u32 %v233, %v249
    %v252 = vor.u32 %v250, %v251
    %v253 = vsub.s32 4294967266, %v248
    %v254 = vadd.s32 %v253, 127
    %v255 = vshll.u32 %v254, 23
    %v256 = vor.u32 4788187, %v255
    %v257 = vand.u32 2147483647, %v256
    %v259 = vcvt.s32.f32 %v252
    %v260 = vmul.f32 %v259, %v257
    %v261 = vxor.u32 %v260, 2147483648
    %v262 = vsel %vm179, %v261, %v260
    %v263 = vsub.s32 4, %v239
    %v264 = vsel %vm179, %v263, %v239
    %v265 = vsel %vm178, %v174, %v262
    %v266 = vsel %vm178, 0, %v264
    %v267 = vcosq.f32.pop %v265
    %v268 = vsinq.f32.pop %v265
    %vm269 = vweird.f32 %v174
    %v270 = vand.u32 %v266, 3
    %vm271 = vcmp.lt.s32.totalorder %v270, 2
    %vm272 = vcmp.eq.s32.totalorder %v270, 0
    %v273 = vxor.u32 %v268, 2147483648
    %v274 = vsel %vm272, %v267, %v273
    %vm275 = vcmp.eq.s32.totalorder %v270, 2
    %v276 = vxor.u32 %v267, 2147483648
    %v277 = vsel %vm275, %v276, %v268
    %v278 = vsel %vm271, %v274, %v277
    %v279 = vsel %vm269, nan, %v278
    %v280 = vand.u32 2147483647, %v175
    %vm281 = vcmp.le.f32.partialorder %v280, 0.7853982
    %vm282 = vcmp.lt.s32.totalorder %v175, 0
    %v283 = vand.u32 %v175, 2139095040
    %v284 = vshrl.u32 %v283, 23
    %v285 = vsub.s32 %v284, 127
    %v286 = vand.u32 2147483647, %v175
    %v287 = vand.u32 %v286, 8388607
    %v288 = vor.u32 %v287, 8388608
    %v289 = vsub.s32 0, %v288
    %v290 = vadd.s32 %v285, 1
    %vm291 = vcmp.gt.s32.totalorder %v290, 0
    %v292 = vsel %vm291, %v290, 0
    %v293 = vshrl.u32 %v292, 5
    %v294 = vand.u32 %v292, 31
    %v295 = vsub.s32 32, %v294
    %v296 = vshrl.u32 683565275, %v295
    %v297 = vshll.u32 683565275, %v294
    %v298 = vshrl.u32 2475754826, %v295
    %v299 = vor.u32 %v297, %v298
    %v300 = vshll.u32 2475754826, %v294
    %v301 = vshrl.u32 2131351028, %v295
    %v302 = vor.u32 %v300, %v301
    %v303 = vshll.u32 2131351028, %v294
    %v304 = vshrl.u32 2102212464, %v295
    %v305 = vor.u32 %v303, %v304
    %v306 = vshll.u32 2102212464, %v294
    %v307 = vshrl.u32 920167782, %v295
    %v308 = vor.u32 %v306, %v307
    %v309 = vshll.u32 920167782, %v294
    %v310 = vshrl.u32 1326507024, %v295
    %v311 = vor.u32 %v309, %v310
    %vm312 = vcmp.lt.s32.totalorder %v293, 1
    %vm313 = vcmp.lt.s32.totalorder %v293, 2
    %vm314 = vcmp.lt.s32.totalorder %v293, 3
    %vm315 = vcmp.lt.s32.totalorder %v293, 4
    %v316 = vsel %vm312, %v296, %v299
    %v317 = vsel %vm315, %v305, 2102212464
    %v318 = vsel %vm314, %v302, %v317
    %v319 = vsel %vm313, %v316, %v318
    %v320 = vsel %vm312, %v299, %v302
    %v321 = vsel %vm315, %v308, 920167782
    %v322 = vsel %vm314, %v305, %v321
    %v323 = vsel %vm313, %v320, %v322
    %v324 = vsel %vm312, %v302, %v305
    %v325 = vsel %vm315, %v311, 1326507024
    %v326 = vsel %vm314, %v308, %v325
    %v327 = vsel %vm313, %v324, %v326
    %v328 = vshll.u32 %v288, 8
    %v329 = vmul.u32.u64.compose %v328, %v327
    %v330 = vextract.low.u32 %v329
    %v331 = vextract.high.u32 %v329
    %v332 = vmul.u32.u64.compose %v328, %v323
    %v333 = vextract.low.u32 %v332
    %v334 = vextract.high.u32 %v332
    %v335 = vmul.u32 %v328, %v319
    %v336 = vadd.s32 %v331, %v333
    %vm337 = vc.u32 %v331, %v333
    %v338 = vadd.s32 %v334, 1
    %v339 = vsel %vm337, %v338, %v334
    %v340 = vadd.s32 %v335, %v339
    %v341 = vadd.s32 %v340, 536870912
    %v342 = vshrl.u32 %v341, 30
    %v343 = vshll.u32 %v342, 30
    %v344 = vsub.s32 %v340, %v343
    %vm345 = vcmp.lt.s32.totalorder %v344, 0
    %v346 = vsub.s32 0, %v344
    %v347 = vsel %vm345, %v346, %v344
    %v348 = vclz %v347
    %v349 = vsub.s32 %v348, 2
    %vm350 = vcmp.gt.s32.totalorder 0, %v349
    %v351 = vsel %vm350, 0, %v349
    %v352 = vsub.s32 32, %v351
    %v353 = vshll.u32 %v344, %v351
    %v354 = vshrl.u32 %v336, %v352
    %v355 = vor.u32 %v353, %v354
    %v356 = vsub.s32 4294967266, %v351
    %v357 = vadd.s32 %v356, 127
    %v358 = vshll.u32 %v357, 23
    %v359 = vor.u32 4788187, %v358
    %v360 = vand.u32 2147483647, %v359
    %v362 = vcvt.s32.f32 %v355
    %v363 = vmul.f32 %v362, %v360
    %v364 = vxor.u32 %v363, 2147483648
    %v365 = vsel %vm282, %v364, %v363
    %v366 = vsub.s32 4, %v342
    %v367 = vsel %vm282, %v366, %v342
    %v368 = vsel %vm281, %v175, %v365
    %v369 = vsel %vm281, 0, %v367
    %v370 = vcosq.f32.pop %v368
    %v371 = vsinq.f32.pop %v368
    %vm372 = vweird.f32 %v175
    %v373 = vand.u32 %v369, 3
    %vm374 = vcmp.lt.s32.totalorder %v373, 2
    %vm375 = vcmp.eq.s32.totalorder %v373, 0
    %v376 = vxor.u32 %v371, 2147483648
    %v377 = vsel %vm375, %v370, %v376
    %vm378 = vcmp.eq.s32.totalorder %v373, 2
    %v379 = vxor.u32 %v370, 2147483648
    %v380 = vsel %vm378, %v379, %v371
    %v381 = vsel %vm374, %v377, %v380
    %v382 = vsel %vm372, nan, %v381
    %v383 = vand.u32 2147483647, %v176
    %vm384 = vcmp.le.f32.partialorder %v383, 0.7853982
    %vm385 = vcmp.lt.s32.totalorder %v176, 0
    %v386 = vand.u32 %v176, 2139095040
    %v387 = vshrl.u32 %v386, 23
    %v388 = vsub.s32 %v387, 127
    %v389 = vand.u32 2147483647, %v176
    %v390 = vand.u32 %v389, 8388607
    %v391 = vor.u32 %v390, 8388608
    %v392 = vsub.s32 0, %v391
    %v393 = vadd.s32 %v388, 1
    %vm394 = vcmp.gt.s32.totalorder %v393, 0
    %v395 = vsel %vm394, %v393, 0
    %v396 = vshrl.u32 %v395, 5
    %v397 = vand.u32 %v395, 31
    %v398 = vsub.s32 32, %v397
    %v399 = vshrl.u32 683565275, %v398
    %v400 = vshll.u32 683565275, %v397
    %v401 = vshrl.u32 2475754826, %v398
    %v402 = vor.u32 %v400, %v401
    %v403 = vshll.u32 2475754826, %v397
    %v404 = vshrl.u32 2131351028, %v398
    %v405 = vor.u32 %v403, %v404
    %v406 = vshll.u32 2131351028, %v397
    %v407 = vshrl.u32 2102212464, %v398
    %v408 = vor.u32 %v406, %v407
    %v409 = vshll.u32 2102212464, %v397
    %v410 = vshrl.u32 920167782, %v398
    %v411 = vor.u32 %v409, %v410
    %v412 = vshll.u32 920167782, %v397
    %v413 = vshrl.u32 1326507024, %v398
    %v414 = vor.u32 %v412, %v413
    %vm415 = vcmp.lt.s32.totalorder %v396, 1
    %vm416 = vcmp.lt.s32.totalorder %v396, 2
    %vm417 = vcmp.lt.s32.totalorder %v396, 3
    %vm418 = vcmp.lt.s32.totalorder %v396, 4
    %v419 = vsel %vm415, %v399, %v402
    %v420 = vsel %vm418, %v408, 2102212464
    %v421 = vsel %vm417, %v405, %v420
    %v422 = vsel %vm416, %v419, %v421
    %v423 = vsel %vm415, %v402, %v405
    %v424 = vsel %vm418, %v411, 920167782
    %v425 = vsel %vm417, %v408, %v424
    %v426 = vsel %vm416, %v423, %v425
    %v427 = vsel %vm415, %v405, %v408
    %v428 = vsel %vm418, %v414, 1326507024
    %v429 = vsel %vm417, %v411, %v428
    %v430 = vsel %vm416, %v427, %v429
    %v431 = vshll.u32 %v391, 8
    %v432 = vmul.u32.u64.compose %v431, %v430
    %v433 = vextract.low.u32 %v432
    %v434 = vextract.high.u32 %v432
    %v435 = vmul.u32.u64.compose %v431, %v426
    %v436 = vextract.low.u32 %v435
    %v437 = vextract.high.u32 %v435
    %v438 = vmul.u32 %v431, %v422
    %v439 = vadd.s32 %v434, %v436
    %vm440 = vc.u32 %v434, %v436
    %v441 = vadd.s32 %v437, 1
    %v442 = vsel %vm440, %v441, %v437
    %v443 = vadd.s32 %v438, %v442
    %v444 = vadd.s32 %v443, 536870912
    %v445 = vshrl.u32 %v444, 30
    %v446 = vshll.u32 %v445, 30
    %v447 = vsub.s32 %v443, %v446
    %vm448 = vcmp.lt.s32.totalorder %v447, 0
    %v449 = vsub.s32 0, %v447
    %v450 = vsel %vm448, %v449, %v447
    %v451 = vclz %v450
    %v452 = vsub.s32 %v451, 2
    %vm453 = vcmp.gt.s32.totalorder 0, %v452
    %v454 = vsel %vm453, 0, %v452
    %v455 = vsub.s32 32, %v454
    %v456 = vshll.u32 %v447, %v454
    %v457 = vshrl.u32 %v439, %v455
    %v458 = vor.u32 %v456, %v457
    %v459 = vsub.s32 4294967266, %v454
    %v460 = vadd.s32 %v459, 127
    %v461 = vshll.u32 %v460, 23
    %v462 = vor.u32 4788187, %v461
    %v463 = vand.u32 2147483647, %v462
    %v465 = vcvt.s32.f32 %v458
    %v466 = vmul.f32 %v465, %v463
    %v467 = vxor.u32 %v466, 2147483648
    %v468 = vsel %vm385, %v467, %v466
    %v469 = vsub.s32 4, %v445
    %v470 = vsel %vm385, %v469, %v445
    %v471 = vsel %vm384, %v176, %v468
    %v472 = vsel %vm384, 0, %v470
    %v473 = vcosq.f32.pop %v471
    %v474 = vsinq.f32.pop %v471
    %vm475 = vweird.f32 %v176
    %v476 = vand.u32 %v472, 3
    %vm477 = vcmp.lt.s32.totalorder %v476, 2
    %vm478 = vcmp.eq.s32.totalorder %v476, 0
    %v479 = vxor.u32 %v474, 2147483648
    %v480 = vsel %vm478, %v473, %v479
    %vm481 = vcmp.eq.s32.totalorder %v476, 2
    %v482 = vxor.u32 %v473, 2147483648
    %v483 = vsel %vm481, %v482, %v474
    %v484 = vsel %vm477, %v480, %v483
    %v485 = vsel %vm475, nan, %v484
    %v487 = vsel %vm136, %v102, 0
    %v490 = vsel %vm136, %v103, 0
    %v493 = vsel %vm136, %v104, 0
    %495 = vmatprep.subr.mxu0 0.0
    %496 = vmatpush1.msra.mxu0 %v51
    %497 = vmatprep.subr.mxu0 0.0
    %498 = vmatpush1.msra.mxu0 %v52
    %499 = vmatprep.subr.mxu0 0.0
    %500 = vmatpush1.msra.mxu0 0.0
    %501 = vmatprep.subr.mxu0 0.0
    %502 = vmatpush1.msra.mxu0 0.0
    %503 = vmatprep.subr.mxu0 0.0
    %504 = vmatpush1.msra.mxu0 0.0
    %505 = vmatprep.subr.mxu0 0.0
    %506 = vmatpush1.msra.mxu0 0.0
    %507 = vmatprep.subr.mxu0 0.0
    %508 = vmatpush1.msra.mxu0 0.0
    %509 = vmatprep.subr.mxu0 0.0
    %510 = vmatpush1.msra.mxu0 0.0
    %511 = vmatprep.subr.mxu0 0.0
    %512 = vmatpush1.msra.mxu0 0.0
    %513 = vmatprep.subr.mxu0 0.0
    %514 = vmatpush1.msra.mxu0 0.0
    %515 = vmatprep.subr.mxu0 0.0
    %516 = vmatpush1.msra.mxu0 0.0
    %517 = vmatprep.subr.mxu0 0.0
    %518 = vmatpush1.msra.mxu0 0.0
    %519 = vmatprep.subr.mxu0 0.0
    %520 = vmatpush1.msra.mxu0 0.0
    %521 = vmatprep.subr.mxu0 0.0
    %522 = vmatpush1.msra.mxu0 0.0
    %523 = vmatprep.subr.mxu0 0.0
    %524 = vmatpush1.msra.mxu0 0.0
    %525 = vmatprep.subr.mxu0 0.0
    %526 = vmatpush1.msra.mxu0 0.0
    %527 = vmatprep.subr.mxu0 0.0
    %528 = vmatpush1.msra.mxu0 0.0
    %529 = vmatprep.subr.mxu0 0.0
    %530 = vmatpush1.msra.mxu0 0.0
    %531 = vmatprep.subr.mxu0 0.0
    %532 = vmatpush1.msra.mxu0 0.0
    %533 = vmatprep.subr.mxu0 0.0
    %534 = vmatpush1.msra.mxu0 0.0
    %535 = vmatprep.subr.mxu0 0.0
    %536 = vmatpush1.msra.mxu0 0.0
    %537 = vmatprep.subr.mxu0 0.0
    %538 = vmatpush1.msra.mxu0 0.0
    %539 = vmatprep.subr.mxu0 0.0
    %540 = vmatpush1.msra.mxu0 0.0
    %541 = vmatprep.subr.mxu0 0.0
    %542 = vmatpush1.msra.mxu0 0.0
    %543 = vmatprep.subr.mxu0 0.0
    %544 = vmatpush1.msra.mxu0 0.0
    %545 = vmatprep.subr.mxu0 0.0
    %546 = vmatpush1.msra.mxu0 0.0
    %547 = vmatprep.subr.mxu0 0.0
    %548 = vmatpush1.msra.mxu0 0.0
    %549 = vmatprep.subr.mxu0 0.0
    %550 = vmatpush1.msra.mxu0 0.0
    %551 = vmatprep.subr.mxu0 0.0
    %552 = vmatpush1.msra.mxu0 0.0
    %553 = vmatprep.subr.mxu0 0.0
    %554 = vmatpush1.msra.mxu0 0.0
    %555 = vmatprep.subr.mxu0 0.0
    %556 = vmatpush1.msra.mxu0 0.0
    %557 = vmatprep.subr.mxu0 0.0
    %558 = vmatpush1.msra.mxu0 0.0
    %559 = vmatprep.mubr.f32.mxu0 0.0
    %560 = vmatmul.mubr.f32.gmra.mrb[0].mxu0 %v487
    %v561 = vpop.f32.mrb[0].mxu0
    %v562 = vadd.f32 0.0, %v561
    %v563 = vpop.f32.mrb[0].mxu0
    %564 = vmatprep.mubr.f32.mxu0 0.0
    %565 = vmatmul.mubr.f32.gmra.mrb[0].mxu0 %v490
    %v566 = vpop.f32.mrb[0].mxu0
    %v567 = vadd.f32 0.0, %v566
    %v568 = vpop.f32.mrb[0].mxu0
    %569 = vmatprep.mubr.f32.mxu0 0.0
    %570 = vmatmul.mubr.f32.gmra.mrb[0].mxu0 %v493
    %v571 = vpop.f32.mrb[0].mxu0
    %v572 = vadd.f32 0.0, %v571
    %v573 = vpop.f32.mrb[0].mxu0
    %574 = vdwg.mxu0
    %v575 = vld [vmem:[%s1] sm:$0xff]
    %v576 = vld [vmem:[%s1 + $0x8] sm:$0xff]
    %v577 = vld [vmem:[%s1 + $0x10] sm:$0xff]
    %581 = vrot.lane.b32.xlu0 %v575, 64
    %v582 = vpop.permute.xlu0 %581
    %583 = vrot.lane.b32.xlu0 %v576, 64
    %v584 = vpop.permute.xlu0 %583
    %585 = vrot.lane.b32.xlu0 %v577, 64
    %v586 = vpop.permute.xlu0 %585
    %593 = vrot.lane.b32.xlu0 %v279, 80
    %v594 = vpop.permute.xlu0 %593
    %595 = vrot.lane.b32.xlu0 %v382, 80
    %v596 = vpop.permute.xlu0 %595
    %597 = vrot.lane.b32.xlu0 %v485, 80
    %v598 = vpop.permute.xlu0 %597
    %vm602 = vcmask 523264
    %v603 = vsel %vm602, %v562, %v582
    %v604 = vsel %vm602, %v567, %v584
    %v605 = vsel %vm602, %v572, %v586
    %vm606 = vcmask 654336
    %v607 = vsel %vm606, %v603, %v594
    %v608 = vsel %vm606, %v604, %v596
    %v609 = vsel %vm606, %v605, %v598
    %v611 = vsel %vm67, %v80, 0
    %v614 = vsel %vm67, %v81, 0
    %616 = vmatprep.subr.mxu0 0.0
    %617 = vmatpush1.msra.mxu0 %v607
    %618 = vmatprep.subr.mxu0 0.0
    %619 = vmatpush1.msra.mxu0 %v608
    %620 = vmatprep.subr.mxu0 0.0
    %621 = vmatpush1.msra.mxu0 %v609
    %622 = vmatprep.subr.mxu0 0.0
    %623 = vmatpush1.msra.mxu0 0.0
    %624 = vmatprep.subr.mxu0 0.0
    %625 = vmatpush1.msra.mxu0 0.0
    %626 = vmatprep.subr.mxu0 0.0
    %627 = vmatpush1.msra.mxu0 0.0
    %628 = vmatprep.subr.mxu0 0.0
    %629 = vmatpush1.msra.mxu0 0.0
    %630 = vmatprep.subr.mxu0 0.0
    %631 = vmatpush1.msra.mxu0 0.0
    %632 = vmatprep.subr.mxu0 0.0
    %633 = vmatpush1.msra.mxu0 0.0
    %634 = vmatprep.subr.mxu0 0.0
    %635 = vmatpush1.msra.mxu0 0.0
    %636 = vmatprep.subr.mxu0 0.0
    %637 = vmatpush1.msra.mxu0 0.0
    %638 = vmatprep.subr.mxu0 0.0
    %639 = vmatpush1.msra.mxu0 0.0
    %640 = vmatprep.subr.mxu0 0.0
    %641 = vmatpush1.msra.mxu0 0.0
    %642 = vmatprep.subr.mxu0 0.0
    %643 = vmatpush1.msra.mxu0 0.0
    %644 = vmatprep.subr.mxu0 0.0
    %645 = vmatpush1.msra.mxu0 0.0
    %646 = vmatprep.subr.mxu0 0.0
    %647 = vmatpush1.msra.mxu0 0.0
    %648 = vmatprep.subr.mxu0 0.0
    %649 = vmatpush1.msra.mxu0 0.0
    %650 = vmatprep.subr.mxu0 0.0
    %651 = vmatpush1.msra.mxu0 0.0
    %652 = vmatprep.subr.mxu0 0.0
    %653 = vmatpush1.msra.mxu0 0.0
    %654 = vmatprep.subr.mxu0 0.0
    %655 = vmatpush1.msra.mxu0 0.0
    %656 = vmatprep.subr.mxu0 0.0
    %657 = vmatpush1.msra.mxu0 0.0
    %658 = vmatprep.subr.mxu0 0.0
    %659 = vmatpush1.msra.mxu0 0.0
    %660 = vmatprep.subr.mxu0 0.0
    %661 = vmatpush1.msra.mxu0 0.0
    %662 = vmatprep.subr.mxu0 0.0
    %663 = vmatpush1.msra.mxu0 0.0
    %664 = vmatprep.subr.mxu0 0.0
    %665 = vmatpush1.msra.mxu0 0.0
    %666 = vmatprep.subr.mxu0 0.0
    %667 = vmatpush1.msra.mxu0 0.0
    %668 = vmatprep.subr.mxu0 0.0
    %669 = vmatpush1.msra.mxu0 0.0
    %670 = vmatprep.subr.mxu0 0.0
    %671 = vmatpush1.msra.mxu0 0.0
    %672 = vmatprep.subr.mxu0 0.0
    %673 = vmatpush1.msra.mxu0 0.0
    %674 = vmatprep.subr.mxu0 0.0
    %675 = vmatpush1.msra.mxu0 0.0
    %676 = vmatprep.subr.mxu0 0.0
    %677 = vmatpush1.msra.mxu0 0.0
    %678 = vmatprep.subr.mxu0 0.0
    %679 = vmatpush1.msra.mxu0 0.0
    %680 = vmatprep.mubr.f32.mxu0 0.0
    %681 = vmatmul.mubr.f32.gmra.mrb[0].mxu0 %v611
    %v682 = vpop.f32.mrb[0].mxu0
    %v683 = vadd.f32 0.0, %v682
    %v684 = vpop.f32.mrb[0].mxu0
    %685 = vmatprep.mubr.f32.mxu0 0.0
    %686 = vmatmul.mubr.f32.gmra.mrb[0].mxu0 %v614
    %v687 = vpop.f32.mrb[0].mxu0
    %v688 = vadd.f32 0.0, %v687
    %v689 = vpop.f32.mrb[0].mxu0
    %690 = vdwg.mxu0
    %693 = vrot.lane.b32.xlu0 %v683, 64
    %v694 = vpop.permute.xlu0 %693
    %695 = vrot.lane.b32.xlu0 %v688, 64
    %v696 = vpop.permute.xlu0 %695
    %v699 = vsel %vm602, %v51, %v694
    %v700 = vsel %vm602, %v52, %v696
    %v701 = vld [vmem:[%s9] sm:$0xff]
    %v702 = vld [vmem:[%s9 + $0x8] sm:$0xff]
    %v703 = vld [vmem:[%s9 + $0x10] sm:$0xff]
    %v704 = vld [vmem:[%s9 + $0x18] sm:$0xff]
    %v705 = vld [vmem:[%s9 + $0x20] sm:$0xff]
    %v706 = vld [vmem:[%s9 + $0x28] sm:$0xff]
    %v707 = vld [vmem:[%s9 + $0x30] sm:$0xff]
    %v708 = vld [vmem:[%s9 + $0x38] sm:$0xff]
    %v709 = vld [vmem:[%s9 + $0x40] sm:$0xff]
    %v710 = vld [vmem:[%s9 + $0x48] sm:$0xff]
    %v711 = vld [vmem:[%s9 + $0x50] sm:$0xff]
    %v712 = vld [vmem:[%s9 + $0x58] sm:$0xff]
    %v713 = vld [vmem:[%s9 + $0x60] sm:$0xff]
    %v714 = vld [vmem:[%s9 + $0x68] sm:$0xff]
    %v715 = vld [vmem:[%s9 + $0x70] sm:$0xff]
    %v716 = vld [vmem:[%s9 + $0x78] sm:$0xff]
    %v717 = vld [vmem:[%s9 + $0x80] sm:$0xff]
    %v718 = vld [vmem:[%s9 + $0x88] sm:$0xff]
    %v719 = vld [vmem:[%s9 + $0x90] sm:$0xff]
    %v720 = vld [vmem:[%s9 + $0x98] sm:$0xff]
    %v721 = vld [vmem:[%s10] sm:$0x1]
    %v723 = vlaneseq
    %v724 = vshrl.u32 %v723, 7
    %v725 = vsub.s32 0, %v724
    %v726 = vrot.slane %v721, %v725
    %vm728 = vcmask 261120
    %v729 = vsel %vm728, %v694, 0
    %v731 = vsel %vm728, %v696, 0
    %733 = vmatprep.subr.mxu0 0.0
    %734 = vmatpush1.msra.mxu0 %v701
    %735 = vmatprep.subr.mxu0 0.0
    %736 = vmatpush1.msra.mxu0 %v702
    %737 = vmatprep.subr.mxu0 0.0
    %738 = vmatpush1.msra.mxu0 %v703
    %739 = vmatprep.subr.mxu0 0.0
    %740 = vmatpush1.msra.mxu0 %v704
    %741 = vmatprep.subr.mxu0 0.0
    %742 = vmatpush1.msra.mxu0 %v705
    %743 = vmatprep.subr.mxu0 0.0
    %744 = vmatpush1.msra.mxu0 %v706
    %745 = vmatprep.subr.mxu0 0.0
    %746 = vmatpush1.msra.mxu0 %v707
    %747 = vmatprep.subr.mxu0 0.0
    %748 = vmatpush1.msra.mxu0 %v708
    %749 = vmatprep.subr.mxu0 0.0
    %750 = vmatpush1.msra.mxu0 %v709
    %751 = vmatprep.subr.mxu0 0.0
    %752 = vmatpush1.msra.mxu0 %v710
    %753 = vmatprep.subr.mxu0 0.0
    %754 = vmatpush1.msra.mxu0 %v711
    %755 = vmatprep.subr.mxu0 0.0
    %756 = vmatpush1.msra.mxu0 %v712
    %757 = vmatprep.subr.mxu0 0.0
    %758 = vmatpush1.msra.mxu0 %v713
    %759 = vmatprep.subr.mxu0 0.0
    %760 = vmatpush1.msra.mxu0 %v714
    %761 = vmatprep.subr.mxu0 0.0
    %762 = vmatpush1.msra.mxu0 %v715
    %763 = vmatprep.subr.mxu0 0.0
    %764 = vmatpush1.msra.mxu0 %v716
    %765 = vmatprep.subr.mxu0 0.0
    %766 = vmatpush1.msra.mxu0 %v717
    %767 = vmatprep.subr.mxu0 0.0
    %768 = vmatpush1.msra.mxu0 %v718
    %769 = vmatprep.subr.mxu0 0.0
    %770 = vmatpush1.msra.mxu0 %v719
    %771 = vmatprep.subr.mxu0 0.0
    %772 = vmatpush1.msra.mxu0 %v720
    %773 = vmatprep.subr.mxu0 0.0
    %774 = vmatpush1.msra.mxu0 0.0
    %775 = vmatprep.subr.mxu0 0.0
    %776 = vmatpush1.msra.mxu0 0.0
    %777 = vmatprep.subr.mxu0 0.0
    %778 = vmatpush1.msra.mxu0 0.0
    %779 = vmatprep.subr.mxu0 0.0
    %780 = vmatpush1.msra.mxu0 0.0
    %781 = vmatprep.subr.mxu0 0.0
    %782 = vmatpush1.msra.mxu0 0.0
    %783 = vmatprep.subr.mxu0 0.0
    %784 = vmatpush1.msra.mxu0 0.0
    %785 = vmatprep.subr.mxu0 0.0
    %786 = vmatpush1.msra.mxu0 0.0
    %787 = vmatprep.subr.mxu0 0.0
    %788 = vmatpush1.msra.mxu0 0.0
    %789 = vmatprep.subr.mxu0 0.0
    %790 = vmatpush1.msra.mxu0 0.0
    %791 = vmatprep.subr.mxu0 0.0
    %792 = vmatpush1.msra.mxu0 0.0
    %793 = vmatprep.subr.mxu0 0.0
    %794 = vmatpush1.msra.mxu0 0.0
    %795 = vmatprep.subr.mxu0 0.0
    %796 = vmatpush1.msra.mxu0 0.0
    %797 = vmatprep.mubr.f32.mxu0 %v729
    %798 = vmatmul.mubr.f32.gmra.mrb[0].mxu0 %v699
    %v799 = vpop.f32.mrb[0].mxu0
    %v800 = vadd.f32 %v726, %v799
    %v801 = vpop.f32.mrb[0].mxu0
    %802 = vmatprep.mubr.f32.mxu0 %v731
    %803 = vmatmul.mubr.f32.gmra.mrb[0].mxu0 %v700
    %v804 = vpop.f32.mrb[0].mxu0
    %v805 = vadd.f32 %v726, %v804
    %v806 = vpop.f32.mrb[0].mxu0
    %807 = vdwg.mxu0
    %v808 = vmax.f32 %v800, 0.0
    %v809 = vmax.f32 %v805, 0.0
    %v810 = vld [vmem:[%s7] sm:$0xff]
    %v811 = vld [vmem:[%s7 + $0x8] sm:$0xff]
    %v812 = vld [vmem:[%s7 + $0x10] sm:$0xff]
    %813 = vset.pattern.permute.xlu0 0
    %814 = vperm.xlu0 %813, %v810
    %v815 = vpop.permute.xlu0 %814
    %816 = vset.pattern.permute.xlu0 0
    %817 = vperm.xlu0 %816, %v811
    %v818 = vpop.permute.xlu0 %817
    %819 = vset.pattern.permute.xlu0 0
    %820 = vperm.xlu0 %819, %v812
    %v821 = vpop.permute.xlu0 %820
    %vm822 = vcmp.eq.s32.totalorder %v83, %v815
    %vm823 = vcmp.eq.s32.totalorder %v83, %v818
    %vm824 = vcmp.eq.s32.totalorder %v83, %v821
    %v825 = vsel %vm822, 1, 0
    %v826 = vsel %vm823, 1, 0
    %v827 = vsel %vm824, 1, 0
    %v828 = vcvt.s32.f32 %v825
    %v829 = vcvt.s32.f32 %v826
    %v830 = vcvt.s32.f32 %v827
    %v832 = vsel %vm136, %v828, 0
    %v835 = vsel %vm136, %v829, 0
    %v838 = vsel %vm136, %v830, 0
    %840 = vmatprep.subr.mxu0 0.0
    %841 = vmatpush1.msra.mxu0 %v808
    %842 = vmatprep.subr.mxu0 0.0
    %843 = vmatpush1.msra.mxu0 %v809
    %844 = vmatprep.subr.mxu0 0.0
    %845 = vmatpush1.msra.mxu0 0.0
    %846 = vmatprep.subr.mxu0 0.0
    %847 = vmatpush1.msra.mxu0 0.0
    %848 = vmatprep.subr.mxu0 0.0
    %849 = vmatpush1.msra.mxu0 0.0
    %850 = vmatprep.subr.mxu0 0.0
    %851 = vmatpush1.msra.mxu0 0.0
    %852 = vmatprep.subr.mxu0 0.0
    %853 = vmatpush1.msra.mxu0 0.0
    %854 = vmatprep.subr.mxu0 0.0
    %855 = vmatpush1.msra.mxu0 0.0
    %856 = vmatprep.subr.mxu0 0.0
    %857 = vmatpush1.msra.mxu0 0.0
    %858 = vmatprep.subr.mxu0 0.0
    %859 = vmatpush1.msra.mxu0 0.0
    %860 = vmatprep.subr.mxu0 0.0
    %861 = vmatpush1.msra.mxu0 0.0
    %862 = vmatprep.subr.mxu0 0.0
    %863 = vmatpush1.msra.mxu0 0.0
    %864 = vmatprep.subr.mxu0 0.0
    %865 = vmatpush1.msra.mxu0 0.0
    %866 = vmatprep.subr.mxu0 0.0
    %867 = vmatpush1.msra.mxu0 0.0
    %868 = vmatprep.subr.mxu0 0.0
    %869 = vmatpush1.msra.mxu0 0.0
    %870 = vmatprep.subr.mxu0 0.0
    %871 = vmatpush1.msra.mxu0 0.0
    %872 = vmatprep.subr.mxu0 0.0
    %873 = vmatpush1.msra.mxu0 0.0
    %874 = vmatprep.subr.mxu0 0.0
    %875 = vmatpush1.msra.mxu0 0.0
    %876 = vmatprep.subr.mxu0 0.0
    %877 = vmatpush1.msra.mxu0 0.0
    %878 = vmatprep.subr.mxu0 0.0
    %879 = vmatpush1.msra.mxu0 0.0
    %880 = vmatprep.subr.mxu0 0.0
    %881 = vmatpush1.msra.mxu0 0.0
    %882 = vmatprep.subr.mxu0 0.0
    %883 = vmatpush1.msra.mxu0 0.0
    %884 = vmatprep.subr.mxu0 0.0
    %885 = vmatpush1.msra.mxu0 0.0
    %886 = vmatprep.subr.mxu0 0.0
    %887 = vmatpush1.msra.mxu0 0.0
    %888 = vmatprep.subr.mxu0 0.0
    %889 = vmatpush1.msra.mxu0 0.0
    %890 = vmatprep.subr.mxu0 0.0
    %891 = vmatpush1.msra.mxu0 0.0
    %892 = vmatprep.subr.mxu0 0.0
    %893 = vmatpush1.msra.mxu0 0.0
    %894 = vmatprep.subr.mxu0 0.0
    %895 = vmatpush1.msra.mxu0 0.0
    %896 = vmatprep.subr.mxu0 0.0
    %897 = vmatpush1.msra.mxu0 0.0
    %898 = vmatprep.subr.mxu0 0.0
    %899 = vmatpush1.msra.mxu0 0.0
    %900 = vmatprep.subr.mxu0 0.0
    %901 = vmatpush1.msra.mxu0 0.0
    %902 = vmatprep.subr.mxu0 0.0
    %903 = vmatpush1.msra.mxu0 0.0
    %904 = vmatprep.mubr.f32.mxu0 0.0
    %905 = vmatmul.mubr.f32.gmra.mrb[0].mxu0 %v832
    %v906 = vpop.f32.mrb[0].mxu0
    %v907 = vadd.f32 0.0, %v906
    %v908 = vpop.f32.mrb[0].mxu0
    %909 = vmatprep.mubr.f32.mxu0 0.0
    %910 = vmatmul.mubr.f32.gmra.mrb[0].mxu0 %v835
    %v911 = vpop.f32.mrb[0].mxu0
    %v912 = vadd.f32 0.0, %v911
    %v913 = vpop.f32.mrb[0].mxu0
    %914 = vmatprep.mubr.f32.mxu0 0.0
    %915 = vmatmul.mubr.f32.gmra.mrb[0].mxu0 %v838
    %v916 = vpop.f32.mrb[0].mxu0
    %v917 = vadd.f32 0.0, %v916
    %v918 = vpop.f32.mrb[0].mxu0
    %919 = vdwg.mxu0
    %921 = vrot.lane.b32.xlu0 %v912, 64
    %v922 = vpop.permute.xlu0 %921
    %v924 = vsel %vm602, %v907, %v922
    %926 = vrot.lane.b32.xlu0 %v917, 64
    %v927 = vpop.permute.xlu0 %926
    %v929 = vsel %vm602, %v907, %v927
    %v930 = vld [vmem:[%s11] sm:$0xff]
    %v931 = vld [vmem:[%s11 + $0x8] sm:$0xff]
    %v932 = vld [vmem:[%s11 + $0x10] sm:$0xff]
    %v933 = vld [vmem:[%s11 + $0x18] sm:$0xff]
    %v934 = vld [vmem:[%s11 + $0x20] sm:$0xff]
    %v935 = vld [vmem:[%s11 + $0x28] sm:$0xff]
    %v936 = vld [vmem:[%s11 + $0x30] sm:$0xff]
    %v937 = vld [vmem:[%s11 + $0x38] sm:$0xff]
    %v938 = vld [vmem:[%s11 + $0x40] sm:$0xff]
    %v939 = vld [vmem:[%s11 + $0x48] sm:$0xff]
    %v940 = vld [vmem:[%s11 + $0x50] sm:$0xff]
    %v941 = vld [vmem:[%s11 + $0x58] sm:$0xff]
    %v942 = vld [vmem:[%s11 + $0x60] sm:$0xff]
    %v943 = vld [vmem:[%s11 + $0x68] sm:$0xff]
    %v944 = vld [vmem:[%s11 + $0x70] sm:$0xff]
    %v945 = vld [vmem:[%s11 + $0x78] sm:$0xff]
    %v946 = vld [vmem:[%s12] sm:$0x1]
    %v948 = vlaneseq
    %v949 = vshrl.u32 %v948, 7
    %v950 = vsub.s32 0, %v949
    %v951 = vrot.slane %v946, %v950
    %953 = vmatprep.subr.mxu0 0.0
    %954 = vmatpush1.msra.mxu0 %v930
    %955 = vmatprep.subr.mxu0 0.0
    %956 = vmatpush1.msra.mxu0 %v931
    %957 = vmatprep.subr.mxu0 0.0
    %958 = vmatpush1.msra.mxu0 %v932
    %959 = vmatprep.subr.mxu0 0.0
    %960 = vmatpush1.msra.mxu0 %v933
    %961 = vmatprep.subr.mxu0 0.0
    %962 = vmatpush1.msra.mxu0 %v934
    %963 = vmatprep.subr.mxu0 0.0
    %964 = vmatpush1.msra.mxu0 %v935
    %965 = vmatprep.subr.mxu0 0.0
    %966 = vmatpush1.msra.mxu0 %v936
    %967 = vmatprep.subr.mxu0 0.0
    %968 = vmatpush1.msra.mxu0 %v937
    %969 = vmatprep.subr.mxu0 0.0
    %970 = vmatpush1.msra.mxu0 %v938
    %971 = vmatprep.subr.mxu0 0.0
    %972 = vmatpush1.msra.mxu0 %v939
    %973 = vmatprep.subr.mxu0 0.0
    %974 = vmatpush1.msra.mxu0 %v940
    %975 = vmatprep.subr.mxu0 0.0
    %976 = vmatpush1.msra.mxu0 %v941
    %977 = vmatprep.subr.mxu0 0.0
    %978 = vmatpush1.msra.mxu0 %v942
    %979 = vmatprep.subr.mxu0 0.0
    %980 = vmatpush1.msra.mxu0 %v943
    %981 = vmatprep.subr.mxu0 0.0
    %982 = vmatpush1.msra.mxu0 %v944
    %983 = vmatprep.subr.mxu0 0.0
    %984 = vmatpush1.msra.mxu0 %v945
    %985 = vmatprep.subr.mxu0 0.0
    %986 = vmatpush1.msra.mxu0 0.0
    %987 = vmatprep.subr.mxu0 0.0
    %988 = vmatpush1.msra.mxu0 0.0
    %989 = vmatprep.subr.mxu0 0.0
    %990 = vmatpush1.msra.mxu0 0.0
    %991 = vmatprep.subr.mxu0 0.0
    %992 = vmatpush1.msra.mxu0 0.0
    %993 = vmatprep.subr.mxu0 0.0
    %994 = vmatpush1.msra.mxu0 0.0
    %995 = vmatprep.subr.mxu0 0.0
    %996 = vmatpush1.msra.mxu0 0.0
    %997 = vmatprep.subr.mxu0 0.0
    %998 = vmatpush1.msra.mxu0 0.0
    %999 = vmatprep.subr.mxu0 0.0
    %1000 = vmatpush1.msra.mxu0 0.0
    %1001 = vmatprep.subr.mxu0 0.0
    %1002 = vmatpush1.msra.mxu0 0.0
    %1003 = vmatprep.subr.mxu0 0.0
    %1004 = vmatpush1.msra.mxu0 0.0
    %1005 = vmatprep.subr.mxu0 0.0
    %1006 = vmatpush1.msra.mxu0 0.0
    %1007 = vmatprep.subr.mxu0 0.0
    %1008 = vmatpush1.msra.mxu0 0.0
    %1009 = vmatprep.subr.mxu0 0.0
    %1010 = vmatpush1.msra.mxu0 0.0
    %1011 = vmatprep.subr.mxu0 0.0
    %1012 = vmatpush1.msra.mxu0 0.0
    %1013 = vmatprep.subr.mxu0 0.0
    %1014 = vmatpush1.msra.mxu0 0.0
    %1015 = vmatprep.subr.mxu0 0.0
    %1016 = vmatpush1.msra.mxu0 0.0
    %1017 = vmatprep.mubr.f32.mxu0 0.0
    %1018 = vmatmul.mubr.f32.gmra.mrb[0].mxu0 %v924
    %v1019 = vpop.f32.mrb[0].mxu0
    %v1020 = vadd.f32 %v951, %v1019
    %v1021 = vpop.f32.mrb[0].mxu0
    %1022 = vmatprep.mubr.f32.mxu0 0.0
    %1023 = vmatmul.mubr.f32.gmra.mrb[0].mxu0 %v929
    %v1024 = vpop.f32.mrb[0].mxu0
    %v1025 = vadd.f32 %v951, %v1024
    %v1026 = vpop.f32.mrb[0].mxu0
    %1027 = vdwg.mxu0
    %v1028 = vmax.f32 %v1020, 0.0
    %v1029 = vmax.f32 %v1025, 0.0
    %v1030 = vld [vmem:[%s13] sm:$0xff]
    %v1031 = vld [vmem:[%s13 + $0x8] sm:$0xff]
    %v1032 = vld [vmem:[%s13 + $0x10] sm:$0xff]
    %v1033 = vld [vmem:[%s13 + $0x18] sm:$0xff]
    %v1034 = vld [vmem:[%s14] sm:$0x1]
    %v1036 = vlaneseq
    %v1037 = vshrl.u32 %v1036, 7
    %v1038 = vsub.s32 0, %v1037
    %v1039 = vrot.slane %v1034, %v1038
    %v1042 = vsel %vm728, %v1028, 0
    %v1045 = vsel %vm728, %v1029, 0
    %1047 = vmatprep.subr.mxu0 0.0
    %1048 = vmatpush1.msra.mxu0 %v1030
    %1049 = vmatprep.subr.mxu0 0.0
    %1050 = vmatpush1.msra.mxu0 %v1031
    %1051 = vmatprep.subr.mxu0 0.0
    %1052 = vmatpush1.msra.mxu0 %v1032
    %1053 = vmatprep.subr.mxu0 0.0
    %1054 = vmatpush1.msra.mxu0 %v1033
    %1055 = vmatprep.subr.mxu0 0.0
    %1056 = vmatpush1.msra.mxu0 0.0
    %1057 = vmatprep.subr.mxu0 0.0
    %1058 = vmatpush1.msra.mxu0 0.0
    %1059 = vmatprep.subr.mxu0 0.0
    %1060 = vmatpush1.msra.mxu0 0.0
    %1061 = vmatprep.subr.mxu0 0.0
    %1062 = vmatpush1.msra.mxu0 0.0
    %1063 = vmatprep.subr.mxu0 0.0
    %1064 = vmatpush1.msra.mxu0 0.0
    %1065 = vmatprep.subr.mxu0 0.0
    %1066 = vmatpush1.msra.mxu0 0.0
    %1067 = vmatprep.subr.mxu0 0.0
    %1068 = vmatpush1.msra.mxu0 0.0
    %1069 = vmatprep.subr.mxu0 0.0
    %1070 = vmatpush1.msra.mxu0 0.0
    %1071 = vmatprep.subr.mxu0 0.0
    %1072 = vmatpush1.msra.mxu0 0.0
    %1073 = vmatprep.subr.mxu0 0.0
    %1074 = vmatpush1.msra.mxu0 0.0
    %1075 = vmatprep.subr.mxu0 0.0
    %1076 = vmatpush1.msra.mxu0 0.0
    %1077 = vmatprep.subr.mxu0 0.0
    %1078 = vmatpush1.msra.mxu0 0.0
    %1079 = vmatprep.subr.mxu0 0.0
    %1080 = vmatpush1.msra.mxu0 0.0
    %1081 = vmatprep.subr.mxu0 0.0
    %1082 = vmatpush1.msra.mxu0 0.0
    %1083 = vmatprep.subr.mxu0 0.0
    %1084 = vmatpush1.msra.mxu0 0.0
    %1085 = vmatprep.subr.mxu0 0.0
    %1086 = vmatpush1.msra.mxu0 0.0
    %1087 = vmatprep.subr.mxu0 0.0
    %1088 = vmatpush1.msra.mxu0 0.0
    %1089 = vmatprep.subr.mxu0 0.0
    %1090 = vmatpush1.msra.mxu0 0.0
    %1091 = vmatprep.subr.mxu0 0.0
    %1092 = vmatpush1.msra.mxu0 0.0
    %1093 = vmatprep.subr.mxu0 0.0
    %1094 = vmatpush1.msra.mxu0 0.0
    %1095 = vmatprep.subr.mxu0 0.0
    %1096 = vmatpush1.msra.mxu0 0.0
    %1097 = vmatprep.subr.mxu0 0.0
    %1098 = vmatpush1.msra.mxu0 0.0
    %1099 = vmatprep.subr.mxu0 0.0
    %1100 = vmatpush1.msra.mxu0 0.0
    %1101 = vmatprep.subr.mxu0 0.0
    %1102 = vmatpush1.msra.mxu0 0.0
    %1103 = vmatprep.subr.mxu0 0.0
    %1104 = vmatpush1.msra.mxu0 0.0
    %1105 = vmatprep.subr.mxu0 0.0
    %1106 = vmatpush1.msra.mxu0 0.0
    %1107 = vmatprep.subr.mxu0 0.0
    %1108 = vmatpush1.msra.mxu0 0.0
    %1109 = vmatprep.subr.mxu0 0.0
    %1110 = vmatpush1.msra.mxu0 0.0
    %1111 = vmatprep.mubr.f32.mxu0 0.0
    %1112 = vmatmul.mubr.f32.gmra.mrb[0].mxu0 %v1042
    %v1113 = vpop.f32.mrb[0].mxu0
    %v1114 = vadd.f32 %v1039, %v1113
    %v1115 = vpop.f32.mrb[0].mxu0
    %1116 = vmatprep.mubr.f32.mxu0 0.0
    %1117 = vmatmul.mubr.f32.gmra.mrb[0].mxu0 %v1045
    %v1118 = vpop.f32.mrb[0].mxu0
    %v1119 = vadd.f32 %v1039, %v1118
    %v1120 = vpop.f32.mrb[0].mxu0
    %1121 = vdwg.mxu0
    %1122 = vst [vmem:[#allocation2] sm:$0xff] %v1114
    %1123 = vst [vmem:[#allocation2 + $0x8] sm:$0xff] %v1119
    // Predicated region
    $region62: #{tpu_custom_call.1} parent=1 // pred_check
      _
    $region63: #{tpu_custom_call.1} parent=1 // pred_check_branch
      %1125 = sbr.rel (0) target = $region65
    $region64: #{tpu_custom_call.1} parent=1 // pred_region
      %s1127 = ssub.s32 256, 256
      %1128 = vsyncadd [#allocation3], %s1127
      %s1129 = sshll.u32 [#allocation2], 4
      %s1130 = int_to_ptr.vmem [resolvable:$true] %s1129
      %1135 = dma.vmem_to_hbm [thread:$0]  %s1130, 256, %s15, [#allocation3], 128, 128, 8
    $region65: #{tpu_custom_call.1} parent=1 // pred_fallthru
      _
    // Predicated region
    $region66: #{tpu_custom_call.1} parent=1 // pred_check
      _
    $region67: #{tpu_custom_call.1} parent=1 // pred_check_branch
      %1137 = sbr.rel (0) target = $region69
    $region68: #{tpu_custom_call.1} parent=1 // pred_region
      %1138 = dma.done [#allocation3], 256
    $region69: #{tpu_custom_call.1} parent=1 // pred_fallthru
      _
    %1139 = vsyncpa [#allocation3], 1

</llo_original>
